<compile_context>
chip_gen: v6e
topology: v6e:2x2x1
jax: 0.10.0
libtpu: 0.0.40
codegen_flags: <defaults>
</compile_context>

<pallas_src>
import jax
import jax.numpy as jnp
from jax.experimental import pallas as pl
from jax.experimental.pallas import tpu as pltpu

SLOPE = 0.1  # leaky-relu negative slope ('lrelu')


def _round_up(x, m):
    return ((x + m - 1) // m) * m


# ----------------------------------------------------------------------------
# Kernel
# ----------------------------------------------------------------------------
def _make_ivae_kernel(data_dim, aux_dim, latent_dim, n_feat, out_w, slope):
    D, A, L, N = data_dim, aux_dim, latent_dim, n_feat
    Din = D + A

    def kernel(in_ref, w_ref, b_ref, out_ref):
        row = in_ref[...]                       # (TB, N) f32 : [x | u | eps | 0]
        eps = row[:, Din:Din + L]               # reparameterization noise
        tb = row.shape[0]

        def dense(h, i, act):
            # bf16 operands on the MXU, f32 accumulation; bias add / lrelu in f32.
            y = jnp.dot(h.astype(jnp.bfloat16), w_ref[i],
                        preferred_element_type=jnp.float32)
            y = y + b_ref[i:i + 1, :]
            return jnp.where(y >= 0, y, slope * y) if act else y

        # --- fused encoder (g | logv) + prior (logl) stack, driven by [x | u] ---
        # layer-0 weight rows beyond Din are zero, so eps / padding columns are inert.
        h = dense(row, 0, True)
        h = dense(h, 1, True)
        enc = dense(h, 2, False)                # cols: [g | logv | logl | 0...]

        g = enc[:, 0:L]
        logv = enc[:, L:2 * L]
        logl = enc[:, 2 * L:3 * L]
        v = jnp.exp(logv)                       # encoder variance
        prior_v = jnp.exp(logl)                 # prior variance
        z = g + eps * jnp.sqrt(v)               # Normal.sample(mu, v)

        # --- decoder f(z) ---
        z_pad = jnp.concatenate(
            [z, jnp.zeros((tb, N - L), jnp.float32)], axis=-1)
        h = dense(z_pad, 3, True)
        h = dense(h, 4, True)
        dec = dense(h, 5, False)                # cols: [f(z) | 0...]
        f_dec = dec[:, 0:D]

        # --- single lane-dense packed output: [f | g | v | z | prior_v | 0] ---
        pieces = [f_dec, g, v, z, prior_v]
        used = D + 4 * L
        if out_w > used:
            pieces.append(jnp.zeros((tb, out_w - used), jnp.float32))
        out_ref[...] = jnp.concatenate(pieces, axis=-1)

    return kernel


# ----------------------------------------------------------------------------
# Parameter construction / packing
# ----------------------------------------------------------------------------
def _init_mlp(key, dims):
    """3-layer MLP params; W stored as (in, out) (pre-transposed for x @ W + b).

    Weights: xavier-uniform (weights_init); biases: torch Linear default
    U(-1/sqrt(fan_in), 1/sqrt(fan_in))."""
    layers = []
    keys = jax.random.split(key, len(dims) - 1)
    for k, (din, dout) in zip(keys, zip(dims[:-1], dims[1:])):
        kw, kb = jax.random.split(k)
        limit = jnp.sqrt(6.0 / (din + dout))
        w = jax.random.uniform(kw, (din, dout), jnp.float32, -limit, limit)
        bb = 1.0 / jnp.sqrt(jnp.float32(din))
        b = jax.random.uniform(kb, (dout,), jnp.float32, -bb, bb)
        layers.append((w, b))
    return layers


def make_ivae_params(key, latent_dim, data_dim, aux_dim, hidden_dim):
    kg, kl, kp, kf = jax.random.split(key, 4)
    din = data_dim + aux_dim
    g_layers    = _init_mlp(kg, [din, hidden_dim, hidden_dim, latent_dim])
    logv_layers = _init_mlp(kl, [din, hidden_dim, hidden_dim, latent_dim])
    logl_layers = _init_mlp(kp, [aux_dim, hidden_dim, hidden_dim, latent_dim])
    f_layers    = _init_mlp(kf, [latent_dim, hidden_dim, hidden_dim, data_dim])
    return g_layers, logv_layers, logl_layers, f_layers


def pack_ivae_params(params, data_dim, aux_dim, latent_dim, hidden_dim, n_feat):
    """Fuse g/logv/logl layer-by-layer and pack everything into two slabs."""
    g_layers, logv_layers, logl_layers, f_layers = params
    D, A, L, H, N = data_dim, aux_dim, latent_dim, hidden_dim, n_feat
    Din, H3, L3 = D + A, 3 * H, 3 * L

    Ws = [jnp.zeros((N, N), jnp.float32) for _ in range(6)]
    bs = [jnp.zeros((N,), jnp.float32) for _ in range(6)]

    # layer 0: input [x | u] -> [g_h | logv_h | logl_h]  (logl sees only u)
    Ws[0] = (Ws[0]
             .at[0:Din, 0:H].set(g_layers[0][0])
             .at[0:Din, H:2 * H].set(logv_layers[0][0])
             .at[D:Din, 2 * H:H3].set(logl_layers[0][0]))
    bs[0] = bs[0].at[0:H3].set(
        jnp.concatenate([g_layers[0][1], logv_layers[0][1], logl_layers[0][1]]))

    # layer 1: block-diagonal (3H, 3H)
    Ws[1] = (Ws[1]
             .at[0:H, 0:H].set(g_layers[1][0])
             .at[H:2 * H, H:2 * H].set(logv_layers[1][0])
             .at[2 * H:H3, 2 * H:H3].set(logl_layers[1][0]))
    bs[1] = bs[1].at[0:H3].set(
        jnp.concatenate([g_layers[1][1], logv_layers[1][1], logl_layers[1][1]]))

    # layer 2: block-diagonal (3H, 3L) -> [g | logv | logl]
    Ws[2] = (Ws[2]
             .at[0:H, 0:L].set(g_layers[2][0])
             .at[H:2 * H, L:2 * L].set(logv_layers[2][0])
             .at[2 * H:H3, 2 * L:L3].set(logl_layers[2][0]))
    bs[2] = bs[2].at[0:L3].set(
        jnp.concatenate([g_layers[2][1], logv_layers[2][1], logl_layers[2][1]]))

    # decoder f: latent -> hidden -> hidden -> data
    f_in, f_out = (L, H, H), (H, H, D)
    for k in range(3):
        Ws[3 + k] = Ws[3 + k].at[0:f_in[k], 0:f_out[k]].set(f_layers[k][0])
        bs[3 + k] = bs[3 + k].at[0:f_out[k]].set(f_layers[k][1])

    w_slab = jnp.stack(Ws).astype(jnp.bfloat16)   # (6, N, N) bf16 -> MXU-native
    b_slab = jnp.stack(bs)                        # (6, N)    f32  -> VPU adds stay f32
    return w_slab, b_slab


# ----------------------------------------------------------------------------
# Wrapper (mirrors iVAE.forward(x, u))
# ----------------------------------------------------------------------------
def ivae_forward(x, u, eps, params):
    B, D = x.shape
    A = u.shape[1]
    L = eps.shape[1]
    H = params[0][0][0].shape[1]
    Din = D + A

    # One lane-dense feature width shared by every fused layer.
    N = _round_up(max(Din + L, 3 * H, 3 * L, H, D), 128)
    OUT_W = _round_up(D + 4 * L, 128)

    w_slab, b_slab = pack_ivae_params(params, D, A, L, H, N)

    # Single packed, lane-padded input slab: [x | u | eps | 0...]  (one DMA).
    in_slab = jnp.concatenate([x, u, eps], axis=1)
    in_slab = jnp.pad(in_slab, ((0, 0), (0, N - (Din + L))))

    TB = B if B <= 256 else 256            # batch tile (multiple of 8 when tiling)
    grid = (pl.cdiv(B, TB),)

    kernel = _make_ivae_kernel(D, A, L, N, OUT_W, SLOPE)

    out = pl.pallas_call(
        kernel,
        out_shape=jax.ShapeDtypeStruct((B, OUT_W), jnp.float32),
        grid=grid,
        in_specs=[
            pl.BlockSpec((TB, N), lambda i: (i, 0)),        # batch-tiled input
            pl.BlockSpec((6, N, N), lambda i: (0, 0, 0)),   # weights: resident
            pl.BlockSpec((6, N), lambda i: (0, 0)),         # biases : resident
        ],
        out_specs=pl.BlockSpec((TB, OUT_W), lambda i: (i, 0)),
        compiler_params=pltpu.CompilerParams(
            dimension_semantics=("parallel",)),             # megacore on v7x
    )(in_slab, w_slab, b_slab)

    f_dec   = out[:, 0:D]
    g       = out[:, D:D + L]
    v       = out[:, D + L:D + 2 * L]
    z       = out[:, D + 2 * L:D + 3 * L]
    prior_v = out[:, D + 3 * L:D + 4 * L]

    decoder_var = jnp.full((1,), 0.01, jnp.float32)   # self.decoder_var
    prior_mean  = jnp.zeros((1,), jnp.float32)        # self.prior_mean
    return (f_dec, decoder_var), (g, v), z, (prior_mean, prior_v)


# ----------------------------------------------------------------------------
# Pure-JAX reference (same bf16-matmul / f32-accumulate numerics, unfused MLPs)
# ----------------------------------------------------------------------------
def _mlp_ref(h, layers):
    n = len(layers)
    for i, (w, b) in enumerate(layers):
        y = jnp.dot(h.astype(jnp.bfloat16), w.astype(jnp.bfloat16),
                    preferred_element_type=jnp.float32) + b
        h = jnp.where(y >= 0, y, SLOPE * y) if i < n - 1 else y
    return h


def _reference_forward(x, u, eps, params):
    g_layers, logv_layers, logl_layers, f_layers = params
    xu = jnp.concatenate([x, u], axis=1)
    g = _mlp_ref(xu, g_layers)
    logv = _mlp_ref(xu, logv_layers)
    v = jnp.exp(logv)
    logl = _mlp_ref(u, logl_layers)
    prior_v = jnp.exp(logl)
    z = g + eps * jnp.sqrt(v)
    f_dec = _mlp_ref(z, f_layers)
    return f_dec, g, v, z, prior_v


if __name__ == "__main__":
    # Small shapes consistent with iVAE(latent_dim, data_dim, aux_dim, n_layers=3, hidden_dim)
    batch, data_dim, aux_dim, latent_dim, hidden_dim = 16, 16, 8, 8, 32

    key = jax.random.PRNGKey(0)
    kx, ku, keps, kp = jax.random.split(key, 4)
    x = jax.random.normal(kx, (batch, data_dim), jnp.float32)
    u = jax.random.normal(ku, (batch, aux_dim), jnp.float32)
    eps = jax.random.normal(keps, (batch, latent_dim), jnp.float32)

    params = make_ivae_params(kp, latent_dim, data_dim, aux_dim, hidden_dim)

    (f_dec, dec_var), (g, v), z, (p_mean, p_var) = ivae_forward(x, u, eps, params)
    jax.block_until_ready((f_dec, g, v, z, p_var))

    f_r, g_r, v_r, z_r, pv_r = _reference_forward(x, u, eps, params)
    tol = dict(rtol=1e-3, atol=1e-3)
    assert jnp.allclose(f_dec, f_r, **tol)
    assert jnp.allclose(g, g_r, **tol)
    assert jnp.allclose(v, v_r, **tol)
    assert jnp.allclose(z, z_r, **tol)
    assert jnp.allclose(p_var, pv_r, **tol)
    # decoder_var / prior_mean are float32 constants (like torch's 0.01*ones(1));
    # compare with a tolerance since float32(0.01) != Python double 0.01 exactly.
    assert abs(float(dec_var[0]) - 0.01) < 1e-7
    assert float(p_mean[0]) == 0.0

    print("KERNEL_OK")
</pallas_src>

<mosaic_0001>
module attributes {stable_mosaic.version = 11 : i64} {
  func.func @kernel(%arg0: i32, %arg1: memref<16x128xf32, #tpu.memory_space<vmem>>, %arg2: memref<6x128x128xbf16, #tpu.memory_space<vmem>>, %arg3: memref<6x128xf32, #tpu.memory_space<vmem>>, %arg4: memref<16x128xf32, #tpu.memory_space<vmem>>) attributes {dimension_semantics = [#tpu.dimension_semantics<parallel>], iteration_bounds = array<i64: 1>, scalar_prefetch = 0 : i64, scratch_operands = 0 : i64, tpu.core_type = #tpu.core_type<tc>, window_params = [{transform_indices = @transform_0, window_bounds = array<i64: 16, 128>}, {pipeline_mode = #tpu.pipeline_mode<synchronous>, transform_indices = @transform_1, window_bounds = array<i64: 6, 128, 128>}, {pipeline_mode = #tpu.pipeline_mode<synchronous>, transform_indices = @transform_2, window_bounds = array<i64: 6, 128>}, {transform_indices = @transform_3, window_bounds = array<i64: 16, 128>}]} {
    %c0 = arith.constant 0 : index
    %c0_0 = arith.constant 0 : index
    %0 = vector.load %arg1[%c0, %c0_0] : memref<16x128xf32, #tpu.memory_space<vmem>>, vector<16x128xf32>
    %1 = vector.extract_strided_slice %0 {offsets = [0, 24], sizes = [16, 8], strides = [1, 1]} : vector<16x128xf32> to vector<16x8xf32>
    %2 = arith.truncf %0 : vector<16x128xf32> to vector<16x128xbf16>
    %c0_1 = arith.constant 0 : index
    %c0_2 = arith.constant 0 : index
    %c0_3 = arith.constant 0 : index
    %3 = vector.load %arg2[%c0_1, %c0_2, %c0_3] : memref<6x128x128xbf16, #tpu.memory_space<vmem>>, vector<1x128x128xbf16>
    %4 = vector.shape_cast %3 : vector<1x128x128xbf16> to vector<128x128xbf16>
    %cst = arith.constant dense<0.000000e+00> : vector<16x128xf32>
    %5 = tpu.matmul %2, %4, %cst {dimension_numbers = #tpu.dot_dimension_numbers<[1], [0], [0], [1], [0, 0, 1, 1], [], []>} : vector<16x128xbf16>, vector<128x128xbf16>, vector<16x128xf32> -> vector<16x128xf32>
    %c0_4 = arith.constant 0 : index
    %c0_5 = arith.constant 0 : index
    %6 = vector.load %arg3[%c0_4, %c0_5] : memref<6x128xf32, #tpu.memory_space<vmem>>, vector<1x128xf32>
    %7 = vector.broadcast %6 : vector<1x128xf32> to vector<16x128xf32>
    %8 = arith.addf %5, %7 : vector<16x128xf32>
    %cst_6 = arith.constant 0.000000e+00 : f32
    %9 = vector.broadcast %cst_6 : f32 to vector<16x128xf32>
    %10 = arith.cmpf oge, %8, %9 : vector<16x128xf32>
    %cst_7 = arith.constant 1.000000e-01 : f32
    %11 = vector.broadcast %cst_7 : f32 to vector<16x128xf32>
    %12 = arith.mulf %11, %8 : vector<16x128xf32>
    %13 = arith.select %10, %8, %12 : vector<16x128xi1>, vector<16x128xf32>
    %14 = arith.truncf %13 : vector<16x128xf32> to vector<16x128xbf16>
    %c1 = arith.constant 1 : index
    %c0_8 = arith.constant 0 : index
    %c0_9 = arith.constant 0 : index
    %15 = vector.load %arg2[%c1, %c0_8, %c0_9] : memref<6x128x128xbf16, #tpu.memory_space<vmem>>, vector<1x128x128xbf16>
    %16 = vector.shape_cast %15 : vector<1x128x128xbf16> to vector<128x128xbf16>
    %cst_10 = arith.constant dense<0.000000e+00> : vector<16x128xf32>
    %17 = tpu.matmul %14, %16, %cst_10 {dimension_numbers = #tpu.dot_dimension_numbers<[1], [0], [0], [1], [0, 0, 1, 1], [], []>} : vector<16x128xbf16>, vector<128x128xbf16>, vector<16x128xf32> -> vector<16x128xf32>
    %c1_11 = arith.constant 1 : index
    %c0_12 = arith.constant 0 : index
    %18 = vector.load %arg3[%c1_11, %c0_12] : memref<6x128xf32, #tpu.memory_space<vmem>>, vector<1x128xf32>
    %19 = vector.broadcast %18 : vector<1x128xf32> to vector<16x128xf32>
    %20 = arith.addf %17, %19 : vector<16x128xf32>
    %cst_13 = arith.constant 0.000000e+00 : f32
    %21 = vector.broadcast %cst_13 : f32 to vector<16x128xf32>
    %22 = arith.cmpf oge, %20, %21 : vector<16x128xf32>
    %cst_14 = arith.constant 1.000000e-01 : f32
    %23 = vector.broadcast %cst_14 : f32 to vector<16x128xf32>
    %24 = arith.mulf %23, %20 : vector<16x128xf32>
    %25 = arith.select %22, %20, %24 : vector<16x128xi1>, vector<16x128xf32>
    %26 = arith.truncf %25 : vector<16x128xf32> to vector<16x128xbf16>
    %c2 = arith.constant 2 : index
    %c0_15 = arith.constant 0 : index
    %c0_16 = arith.constant 0 : index
    %27 = vector.load %arg2[%c2, %c0_15, %c0_16] : memref<6x128x128xbf16, #tpu.memory_space<vmem>>, vector<1x128x128xbf16>
    %28 = vector.shape_cast %27 : vector<1x128x128xbf16> to vector<128x128xbf16>
    %cst_17 = arith.constant dense<0.000000e+00> : vector<16x128xf32>
    %29 = tpu.matmul %26, %28, %cst_17 {dimension_numbers = #tpu.dot_dimension_numbers<[1], [0], [0], [1], [0, 0, 1, 1], [], []>} : vector<16x128xbf16>, vector<128x128xbf16>, vector<16x128xf32> -> vector<16x128xf32>
    %c2_18 = arith.constant 2 : index
    %c0_19 = arith.constant 0 : index
    %30 = vector.load %arg3[%c2_18, %c0_19] : memref<6x128xf32, #tpu.memory_space<vmem>>, vector<1x128xf32>
    %31 = vector.broadcast %30 : vector<1x128xf32> to vector<16x128xf32>
    %32 = arith.addf %29, %31 : vector<16x128xf32>
    %33 = vector.extract_strided_slice %32 {offsets = [0, 0], sizes = [16, 8], strides = [1, 1]} : vector<16x128xf32> to vector<16x8xf32>
    %34 = vector.extract_strided_slice %32 {offsets = [0, 8], sizes = [16, 8], strides = [1, 1]} : vector<16x128xf32> to vector<16x8xf32>
    %35 = vector.extract_strided_slice %32 {offsets = [0, 16], sizes = [16, 8], strides = [1, 1]} : vector<16x128xf32> to vector<16x8xf32>
    %36 = math.exp %34 : vector<16x8xf32>
    %37 = math.exp %35 : vector<16x8xf32>
    %38 = math.sqrt %36 : vector<16x8xf32>
    %39 = arith.mulf %1, %38 : vector<16x8xf32>
    %40 = arith.addf %33, %39 : vector<16x8xf32>
    %cst_20 = arith.constant 0.000000e+00 : f32
    %41 = vector.broadcast %cst_20 : f32 to vector<16x120xf32>
    %42 = tpu.concatenate %40, %41 in 1 : vector<16x8xf32>, vector<16x120xf32> -> vector<16x128xf32>
    %43 = arith.truncf %42 : vector<16x128xf32> to vector<16x128xbf16>
    %c3 = arith.constant 3 : index
    %c0_21 = arith.constant 0 : index
    %c0_22 = arith.constant 0 : index
    %44 = vector.load %arg2[%c3, %c0_21, %c0_22] : memref<6x128x128xbf16, #tpu.memory_space<vmem>>, vector<1x128x128xbf16>
    %45 = vector.shape_cast %44 : vector<1x128x128xbf16> to vector<128x128xbf16>
    %cst_23 = arith.constant dense<0.000000e+00> : vector<16x128xf32>
    %46 = tpu.matmul %43, %45, %cst_23 {dimension_numbers = #tpu.dot_dimension_numbers<[1], [0], [0], [1], [0, 0, 1, 1], [], []>} : vector<16x128xbf16>, vector<128x128xbf16>, vector<16x128xf32> -> vector<16x128xf32>
    %c3_24 = arith.constant 3 : index
    %c0_25 = arith.constant 0 : index
    %47 = vector.load %arg3[%c3_24, %c0_25] : memref<6x128xf32, #tpu.memory_space<vmem>>, vector<1x128xf32>
    %48 = vector.broadcast %47 : vector<1x128xf32> to vector<16x128xf32>
    %49 = arith.addf %46, %48 : vector<16x128xf32>
    %cst_26 = arith.constant 0.000000e+00 : f32
    %50 = vector.broadcast %cst_26 : f32 to vector<16x128xf32>
    %51 = arith.cmpf oge, %49, %50 : vector<16x128xf32>
    %cst_27 = arith.constant 1.000000e-01 : f32
    %52 = vector.broadcast %cst_27 : f32 to vector<16x128xf32>
    %53 = arith.mulf %52, %49 : vector<16x128xf32>
    %54 = arith.select %51, %49, %53 : vector<16x128xi1>, vector<16x128xf32>
    %55 = arith.truncf %54 : vector<16x128xf32> to vector<16x128xbf16>
    %c4 = arith.constant 4 : index
    %c0_28 = arith.constant 0 : index
    %c0_29 = arith.constant 0 : index
    %56 = vector.load %arg2[%c4, %c0_28, %c0_29] : memref<6x128x128xbf16, #tpu.memory_space<vmem>>, vector<1x128x128xbf16>
    %57 = vector.shape_cast %56 : vector<1x128x128xbf16> to vector<128x128xbf16>
    %cst_30 = arith.constant dense<0.000000e+00> : vector<16x128xf32>
    %58 = tpu.matmul %55, %57, %cst_30 {dimension_numbers = #tpu.dot_dimension_numbers<[1], [0], [0], [1], [0, 0, 1, 1], [], []>} : vector<16x128xbf16>, vector<128x128xbf16>, vector<16x128xf32> -> vector<16x128xf32>
    %c4_31 = arith.constant 4 : index
    %c0_32 = arith.constant 0 : index
    %59 = vector.load %arg3[%c4_31, %c0_32] : memref<6x128xf32, #tpu.memory_space<vmem>>, vector<1x128xf32>
    %60 = vector.broadcast %59 : vector<1x128xf32> to vector<16x128xf32>
    %61 = arith.addf %58, %60 : vector<16x128xf32>
    %cst_33 = arith.constant 0.000000e+00 : f32
    %62 = vector.broadcast %cst_33 : f32 to vector<16x128xf32>
    %63 = arith.cmpf oge, %61, %62 : vector<16x128xf32>
    %cst_34 = arith.constant 1.000000e-01 : f32
    %64 = vector.broadcast %cst_34 : f32 to vector<16x128xf32>
    %65 = arith.mulf %64, %61 : vector<16x128xf32>
    %66 = arith.select %63, %61, %65 : vector<16x128xi1>, vector<16x128xf32>
    %67 = arith.truncf %66 : vector<16x128xf32> to vector<16x128xbf16>
    %c5 = arith.constant 5 : index
    %c0_35 = arith.constant 0 : index
    %c0_36 = arith.constant 0 : index
    %68 = vector.load %arg2[%c5, %c0_35, %c0_36] : memref<6x128x128xbf16, #tpu.memory_space<vmem>>, vector<1x128x128xbf16>
    %69 = vector.shape_cast %68 : vector<1x128x128xbf16> to vector<128x128xbf16>
    %cst_37 = arith.constant dense<0.000000e+00> : vector<16x128xf32>
    %70 = tpu.matmul %67, %69, %cst_37 {dimension_numbers = #tpu.dot_dimension_numbers<[1], [0], [0], [1], [0, 0, 1, 1], [], []>} : vector<16x128xbf16>, vector<128x128xbf16>, vector<16x128xf32> -> vector<16x128xf32>
    %c5_38 = arith.constant 5 : index
    %c0_39 = arith.constant 0 : index
    %71 = vector.load %arg3[%c5_38, %c0_39] : memref<6x128xf32, #tpu.memory_space<vmem>>, vector<1x128xf32>
    %72 = vector.broadcast %71 : vector<1x128xf32> to vector<16x128xf32>
    %73 = arith.addf %70, %72 : vector<16x128xf32>
    %74 = vector.extract_strided_slice %73 {offsets = [0, 0], sizes = [16, 16], strides = [1, 1]} : vector<16x128xf32> to vector<16x16xf32>
    %cst_40 = arith.constant 0.000000e+00 : f32
    %75 = vector.broadcast %cst_40 : f32 to vector<16x80xf32>
    %76 = tpu.concatenate %74, %33, %36, %40, %37, %75 in 1 : vector<16x16xf32>, vector<16x8xf32>, vector<16x8xf32>, vector<16x8xf32>, vector<16x8xf32>, vector<16x80xf32> -> vector<16x128xf32>
    %c0_41 = arith.constant 0 : index
    %c0_42 = arith.constant 0 : index
    %77 = vector.load %arg4[%c0_41, %c0_42] : memref<16x128xf32, #tpu.memory_space<vmem>>, vector<16x128xf32>
    tpu.vector_store %arg4[%c0_41, %c0_42], %76 {strides = array<i32>} : memref<16x128xf32, #tpu.memory_space<vmem>>, vector<16x128xf32>,
    return
  }
  func.func @transform_0(%arg0: i32) -> (i32, i32) {
    %c0_i32 = arith.constant 0 : i32
    %c0_i32_0 = arith.constant 0 : i32
    return %arg0, %c0_i32 : i32, i32
  }
  func.func @transform_1(%arg0: i32) -> (i32, i32, i32) {
    %c0_i32 = arith.constant 0 : i32
    %c0_i32_0 = arith.constant 0 : i32
    %c0_i32_1 = arith.constant 0 : i32
    %c0_i32_2 = arith.constant 0 : i32
    return %c0_i32, %c0_i32_0, %c0_i32_1 : i32, i32, i32
  }
  func.func @transform_2(%arg0: i32) -> (i32, i32) {
    %c0_i32 = arith.constant 0 : i32
    %c0_i32_0 = arith.constant 0 : i32
    %c0_i32_1 = arith.constant 0 : i32
    return %c0_i32, %c0_i32_0 : i32, i32
  }
  func.func @transform_3(%arg0: i32) -> (i32, i32) {
    %c0_i32 = arith.constant 0 : i32
    %c0_i32_0 = arith.constant 0 : i32
    return %arg0, %c0_i32 : i32, i32
  }
}

</mosaic_0001>

<llo_original>
// kernel: tpu_custom_call.1
$region0: #{tpu_custom_call.1}
  #allocation0 [shape = 'u32[]', space=smem, size = 0x4, offset = 0x4, fixed_abs, tag = 'smem constant byte address 0x4 - core index']
  #allocation1 [shape = 'u32[144,128]{1,0:T(1,128)}', space=vmem, size = 0x12000, scoped, tag = 'internal scratch']
  %s0 = inlined_call_operand.hbm [shape: f32[16,128], index: 0, kind: input, shape index: {}]
  %s1 = inlined_call_operand.hbm [shape: bf16[6,128,128], index: 1, kind: input, shape index: {}]
  %s2 = inlined_call_operand.hbm [shape: f32[6,128], index: 2, kind: input, shape index: {}]
  %s3 = inlined_call_operand.hbm [shape: f32[16,128], index: 3, kind: output, shape index: {}]
  %s4 = sld [smem:[#allocation0]]
  $region34: #{tpu_custom_call.1} parent=0
    _
  %s6 = ssub.s32 1, %s4
  %s7 = scalar_select 0, %s6, %s4
  $region1: #{tpu_custom_call.1} parent=0
    #allocation2 [shape = 'u8[8192]{0}', space=vmem, size = 0x2000, scoped, tag = 'input window, operand 0, single buffered']
    #allocation3 [shape = 's32[1]{0}', space=sflag, size = 0x4, scoped, tag = 'scoped memory for tpu_custom_call.1']
    #allocation4 [shape = 's32[1]{0}', space=sflag, size = 0x4, scoped, tag = 'scoped memory for tpu_custom_call.1']
    #allocation5 [shape = 'u8[196608]{0}', space=vmem, size = 0x30000, scoped, tag = 'input window, operand 1, single buffered']
    #allocation6 [shape = 's32[1]{0}', space=sflag, size = 0x4, scoped, tag = 'scoped memory for tpu_custom_call.1']
    #allocation7 [shape = 'u8[4096]{0}', space=vmem, size = 0x1000, scoped, tag = 'input window, operand 2, single buffered']
    #allocation8 [shape = 'u8[8192]{0}', space=vmem, size = 0x2000, scoped, tag = 'output window, operand 0, single buffered']
    %8 = vsyncpa [#allocation3], 0
    %9 = vsyncpa [#allocation6], 0
    %10 = vsyncpa [#allocation4], 0
    // Predicated region
    $region2: #{tpu_custom_call.1} parent=1 // pred_check
      _
    $region3: #{tpu_custom_call.1} parent=1 // pred_check_branch
      %12 = sbr.rel (0) target = $region5
    $region4: #{tpu_custom_call.1} parent=1 // pred_region
      %s14 = ssub.s32 256, 256
      %15 = vsyncadd [#allocation3], %s14
      %s16 = sshll.u32 [#allocation2], 4
      %s17 = int_to_ptr.vmem [resolvable:$true] %s16
      %22 = dma.hbm_to_vmem [thread:$0]  %s0, 256, %s17, [#allocation3], 128, 128, 8
    $region5: #{tpu_custom_call.1} parent=1 // pred_fallthru
      _
    // Predicated region
    $region6: #{tpu_custom_call.1} parent=1 // pred_check
      _
    $region7: #{tpu_custom_call.1} parent=1 // pred_check_branch
      %24 = sbr.rel (0) target = $region9
    $region8: #{tpu_custom_call.1} parent=1 // pred_region
      %s26 = ssub.s32 6144, 6144
      %27 = vsyncadd [#allocation6], %s26
      %s28 = sshll.u32 [#allocation5], 4
      %s29 = int_to_ptr.vmem [resolvable:$true] %s28
      %34 = dma.hbm_to_vmem [thread:$0]  %s1, 6144, %s29, [#allocation6], 64, 64, 4
    $region9: #{tpu_custom_call.1} parent=1 // pred_fallthru
      _
    // Predicated region
    $region10: #{tpu_custom_call.1} parent=1 // pred_check
      _
    $region11: #{tpu_custom_call.1} parent=1 // pred_check_branch
      %36 = sbr.rel (0) target = $region13
    $region12: #{tpu_custom_call.1} parent=1 // pred_region
      %s38 = ssub.s32 128, 128
      %39 = vsyncadd [#allocation6], %s38
      %s41 = sshll.u32 [#allocation7], 4
      %s42 = int_to_ptr.vmem [resolvable:$true] %s41
      %44 = dma.hbm_to_vmem [thread:$0]  %s2, 128, %s42, [#allocation6]
    $region13: #{tpu_custom_call.1} parent=1 // pred_fallthru
      _
    // Predicated region
    $region14: #{tpu_custom_call.1} parent=1 // pred_check
      _
    $region15: #{tpu_custom_call.1} parent=1 // pred_check_branch
      %46 = sbr.rel (0) target = $region17
    $region16: #{tpu_custom_call.1} parent=1 // pred_region
      %47 = dma.done [#allocation3], 256
    $region17: #{tpu_custom_call.1} parent=1 // pred_fallthru
      _
    // Predicated region
    $region18: #{tpu_custom_call.1} parent=1 // pred_check
      _
    $region19: #{tpu_custom_call.1} parent=1 // pred_check_branch
      %49 = sbr.rel (0) target = $region21
    $region20: #{tpu_custom_call.1} parent=1 // pred_region
      %50 = dma.done [#allocation6], 6144
    $region21: #{tpu_custom_call.1} parent=1 // pred_fallthru
      _
    // Predicated region
    $region22: #{tpu_custom_call.1} parent=1 // pred_check
      _
    $region23: #{tpu_custom_call.1} parent=1 // pred_check_branch
      %52 = sbr.rel (0) target = $region25
    $region24: #{tpu_custom_call.1} parent=1 // pred_region
      %53 = dma.done [#allocation6], 128
    $region25: #{tpu_custom_call.1} parent=1 // pred_fallthru
      _
    %v55 = vld [vmem:[#allocation2] sm:$0xff]
    %v56 = vld [vmem:[#allocation2 + $0x8] sm:$0xff]
    %v57 = vpack.c.bf16 %v56, %v55
    %v58 = vld [vmem:[#allocation5] sm:$0xf]
    %v59 = vld [vmem:[#allocation5 + $0x4] sm:$0xf]
    %v60 = vld [vmem:[#allocation5 + $0x8] sm:$0xf]
    %v61 = vld [vmem:[#allocation5 + $0xc] sm:$0xf]
    %v62 = vld [vmem:[#allocation5 + $0x10] sm:$0xf]
    %v63 = vld [vmem:[#allocation5 + $0x14] sm:$0xf]
    %v64 = vld [vmem:[#allocation5 + $0x18] sm:$0xf]
    %v65 = vld [vmem:[#allocation5 + $0x1c] sm:$0xf]
    %v66 = vld [vmem:[#allocation5 + $0x20] sm:$0xf]
    %v67 = vld [vmem:[#allocation5 + $0x24] sm:$0xf]
    %v68 = vld [vmem:[#allocation5 + $0x28] sm:$0xf]
    %v69 = vld [vmem:[#allocation5 + $0x2c] sm:$0xf]
    %v70 = vld [vmem:[#allocation5 + $0x30] sm:$0xf]
    %v71 = vld [vmem:[#allocation5 + $0x34] sm:$0xf]
    %v72 = vld [vmem:[#allocation5 + $0x38] sm:$0xf]
    %v73 = vld [vmem:[#allocation5 + $0x3c] sm:$0xf]
    %v74 = vld [vmem:[#allocation7] sm:$0x1]
    %v75 = vlaneseq
    %v76 = vshrl.u32 %v75, 7
    %v77 = vsub.s32 0, %v76
    %v78 = vrot.slane %v74, %v77
    %v95 = vunpack.c.l.b16 %v58
    %v96 = vunpack.c.l.b16 %v59
    %v97 = vunpack.c.l.b16 %v60
    %v98 = vunpack.c.l.b16 %v61
    %v99 = vunpack.c.l.b16 %v62
    %v100 = vunpack.c.l.b16 %v63
    %v101 = vunpack.c.l.b16 %v64
    %v102 = vunpack.c.l.b16 %v65
    %v103 = vunpack.c.l.b16 %v66
    %v104 = vunpack.c.l.b16 %v67
    %v105 = vunpack.c.l.b16 %v68
    %v106 = vunpack.c.l.b16 %v69
    %v107 = vunpack.c.l.b16 %v70
    %v108 = vunpack.c.l.b16 %v71
    %v109 = vunpack.c.l.b16 %v72
    %v110 = vunpack.c.l.b16 %v73
    %v111 = vpack.c.b16 %v96, %v95
    %v112 = vpack.c.b16 %v98, %v97
    %v113 = vpack.c.b16 %v100, %v99
    %v114 = vpack.c.b16 %v102, %v101
    %v115 = vpack.c.b16 %v104, %v103
    %v116 = vpack.c.b16 %v106, %v105
    %v117 = vpack.c.b16 %v108, %v107
    %v118 = vpack.c.b16 %v110, %v109
    %127 = vmatprep.subr.bf16.mxu0 0
    %128 = vmatpush1.bf16.msra.mxu0 %v118
    %129 = vmatprep.subr.bf16.mxu0 0
    %130 = vmatpush1.bf16.msra.mxu0 %v117
    %131 = vmatprep.subr.bf16.mxu0 0
    %132 = vmatpush1.bf16.msra.mxu0 %v116
    %133 = vmatprep.subr.bf16.mxu0 0
    %134 = vmatpush1.bf16.msra.mxu0 %v115
    %135 = vmatprep.subr.bf16.mxu0 0
    %136 = vmatpush1.bf16.msra.mxu0 %v114
    %137 = vmatprep.subr.bf16.mxu0 0
    %138 = vmatpush1.bf16.msra.mxu0 %v113
    %139 = vmatprep.subr.bf16.mxu0 0
    %140 = vmatpush1.bf16.msra.mxu0 %v112
    %141 = vmatprep.subr.bf16.mxu0 0
    %142 = vmatpush1.bf16.msra.mxu0 %v111
    %143 = vmatprep.subr.bf16.mxu0 0
    %144 = vmatpush2.bf16.msra.mxu0 0
    %145 = vmatprep.subr.bf16.mxu0 0
    %146 = vmatpush2.bf16.msra.mxu0 0
    %147 = vmatprep.subr.bf16.mxu0 0
    %148 = vmatpush2.bf16.msra.mxu0 0
    %149 = vmatprep.subr.bf16.mxu0 0
    %150 = vmatpush2.bf16.msra.mxu0 0
    %151 = vmatprep.subr.bf16.mxu0 0
    %152 = vmatpush2.bf16.msra.mxu0 0
    %153 = vmatprep.subr.bf16.mxu0 0
    %154 = vmatpush2.bf16.msra.mxu0 0
    %155 = vmatprep.subr.bf16.mxu0 0
    %156 = vmatpush2.bf16.msra.mxu0 0
    %157 = vmatprep.subr.bf16.mxu0 0
    %158 = vmatpush2.bf16.msra.mxu0 0
    %159 = vmatprep.mubr.bf16.mxu0 0
    %160 = vmatmul.mubr.bf16.gmra.mxu0 %v57
    %v161 = vpop.f32.mrf.mxu0
    %v162 = vadd.f32 %v78, %v161
    %v163 = vpop.f32.mrf.mxu0
    %v164 = vpop.f32.mrf.mxu0
    %v165 = vadd.f32 %v78, %v164
    %v166 = vpop.f32.mrf.mxu0
    %167 = vdwg.mxu0
    %vm168 = vcmp.ge.f32.partialorder %v162, 0.0
    %vm169 = vcmp.ge.f32.partialorder %v165, 0.0
    %v170 = vmul.f32 %v162, 0.1
    %v171 = vmul.f32 %v165, 0.1
    %v172 = vsel %vm168, %v162, %v170
    %v173 = vsel %vm169, %v165, %v171
    %v174 = vpack.c.bf16 %v173, %v172
    %s175 = scalar_lea.vmem [#allocation5], 64
    %v176 = vld [vmem:[%s175] sm:$0xf]
    %v177 = vld [vmem:[%s175 + $0x4] sm:$0xf]
    %v178 = vld [vmem:[%s175 + $0x8] sm:$0xf]
    %v179 = vld [vmem:[%s175 + $0xc] sm:$0xf]
    %v180 = vld [vmem:[%s175 + $0x10] sm:$0xf]
    %v181 = vld [vmem:[%s175 + $0x14] sm:$0xf]
    %v182 = vld [vmem:[%s175 + $0x18] sm:$0xf]
    %v183 = vld [vmem:[%s175 + $0x1c] sm:$0xf]
    %v184 = vld [vmem:[%s175 + $0x20] sm:$0xf]
    %v185 = vld [vmem:[%s175 + $0x24] sm:$0xf]
    %v186 = vld [vmem:[%s175 + $0x28] sm:$0xf]
    %v187 = vld [vmem:[%s175 + $0x2c] sm:$0xf]
    %v188 = vld [vmem:[%s175 + $0x30] sm:$0xf]
    %v189 = vld [vmem:[%s175 + $0x34] sm:$0xf]
    %v190 = vld [vmem:[%s175 + $0x38] sm:$0xf]
    %v191 = vld [vmem:[%s175 + $0x3c] sm:$0xf]
    %v192 = vld [vmem:[#allocation7 + $0x1] sm:$0x1]
    %v193 = vlaneseq
    %v194 = vshrl.u32 %v193, 7
    %v195 = vsub.s32 0, %v194
    %v196 = vrot.slane %v192, %v195
    %v213 = vunpack.c.l.b16 %v176
    %v214 = vunpack.c.l.b16 %v177
    %v215 = vunpack.c.l.b16 %v178
    %v216 = vunpack.c.l.b16 %v179
    %v217 = vunpack.c.l.b16 %v180
    %v218 = vunpack.c.l.b16 %v181
    %v219 = vunpack.c.l.b16 %v182
    %v220 = vunpack.c.l.b16 %v183
    %v221 = vunpack.c.l.b16 %v184
    %v222 = vunpack.c.l.b16 %v185
    %v223 = vunpack.c.l.b16 %v186
    %v224 = vunpack.c.l.b16 %v187
    %v225 = vunpack.c.l.b16 %v188
    %v226 = vunpack.c.l.b16 %v189
    %v227 = vunpack.c.l.b16 %v190
    %v228 = vunpack.c.l.b16 %v191
    %v229 = vpack.c.b16 %v214, %v213
    %v230 = vpack.c.b16 %v216, %v215
    %v231 = vpack.c.b16 %v218, %v217
    %v232 = vpack.c.b16 %v220, %v219
    %v233 = vpack.c.b16 %v222, %v221
    %v234 = vpack.c.b16 %v224, %v223
    %v235 = vpack.c.b16 %v226, %v225
    %v236 = vpack.c.b16 %v228, %v227
    %245 = vmatprep.subr.bf16.mxu0 0
    %246 = vmatpush1.bf16.msra.mxu0 %v236
    %247 = vmatprep.subr.bf16.mxu0 0
    %248 = vmatpush1.bf16.msra.mxu0 %v235
    %249 = vmatprep.subr.bf16.mxu0 0
    %250 = vmatpush1.bf16.msra.mxu0 %v234
    %251 = vmatprep.subr.bf16.mxu0 0
    %252 = vmatpush1.bf16.msra.mxu0 %v233
    %253 = vmatprep.subr.bf16.mxu0 0
    %254 = vmatpush1.bf16.msra.mxu0 %v232
    %255 = vmatprep.subr.bf16.mxu0 0
    %256 = vmatpush1.bf16.msra.mxu0 %v231
    %257 = vmatprep.subr.bf16.mxu0 0
    %258 = vmatpush1.bf16.msra.mxu0 %v230
    %259 = vmatprep.subr.bf16.mxu0 0
    %260 = vmatpush1.bf16.msra.mxu0 %v229
    %261 = vmatprep.subr.bf16.mxu0 0
    %262 = vmatpush2.bf16.msra.mxu0 0
    %263 = vmatprep.subr.bf16.mxu0 0
    %264 = vmatpush2.bf16.msra.mxu0 0
    %265 = vmatprep.subr.bf16.mxu0 0
    %266 = vmatpush2.bf16.msra.mxu0 0
    %267 = vmatprep.subr.bf16.mxu0 0
    %268 = vmatpush2.bf16.msra.mxu0 0
    %269 = vmatprep.subr.bf16.mxu0 0
    %270 = vmatpush2.bf16.msra.mxu0 0
    %271 = vmatprep.subr.bf16.mxu0 0
    %272 = vmatpush2.bf16.msra.mxu0 0
    %273 = vmatprep.subr.bf16.mxu0 0
    %274 = vmatpush2.bf16.msra.mxu0 0
    %275 = vmatprep.subr.bf16.mxu0 0
    %276 = vmatpush2.bf16.msra.mxu0 0
    %277 = vmatprep.mubr.bf16.mxu0 0
    %278 = vmatmul.mubr.bf16.gmra.mxu0 %v174
    %v279 = vpop.f32.mrf.mxu0
    %v280 = vadd.f32 %v196, %v279
    %v281 = vpop.f32.mrf.mxu0
    %v282 = vpop.f32.mrf.mxu0
    %v283 = vadd.f32 %v196, %v282
    %v284 = vpop.f32.mrf.mxu0
    %285 = vdwg.mxu0
    %vm286 = vcmp.ge.f32.partialorder %v280, 0.0
    %vm287 = vcmp.ge.f32.partialorder %v283, 0.0
    %v288 = vmul.f32 %v280, 0.1
    %v289 = vmul.f32 %v283, 0.1
    %v290 = vsel %vm286, %v280, %v288
    %v291 = vsel %vm287, %v283, %v289
    %v292 = vpack.c.bf16 %v291, %v290
    %s293 = scalar_lea.vmem [#allocation5], 128
    %v294 = vld [vmem:[%s293] sm:$0xf]
    %v295 = vld [vmem:[%s293 + $0x4] sm:$0xf]
    %v296 = vld [vmem:[%s293 + $0x8] sm:$0xf]
    %v297 = vld [vmem:[%s293 + $0xc] sm:$0xf]
    %v298 = vld [vmem:[%s293 + $0x10] sm:$0xf]
    %v299 = vld [vmem:[%s293 + $0x14] sm:$0xf]
    %v300 = vld [vmem:[%s293 + $0x18] sm:$0xf]
    %v301 = vld [vmem:[%s293 + $0x1c] sm:$0xf]
    %v302 = vld [vmem:[%s293 + $0x20] sm:$0xf]
    %v303 = vld [vmem:[%s293 + $0x24] sm:$0xf]
    %v304 = vld [vmem:[%s293 + $0x28] sm:$0xf]
    %v305 = vld [vmem:[%s293 + $0x2c] sm:$0xf]
    %v306 = vld [vmem:[%s293 + $0x30] sm:$0xf]
    %v307 = vld [vmem:[%s293 + $0x34] sm:$0xf]
    %v308 = vld [vmem:[%s293 + $0x38] sm:$0xf]
    %v309 = vld [vmem:[%s293 + $0x3c] sm:$0xf]
    %v310 = vld [vmem:[#allocation7 + $0x2] sm:$0x1]
    %v311 = vlaneseq
    %v312 = vshrl.u32 %v311, 7
    %v313 = vsub.s32 0, %v312
    %v314 = vrot.slane %v310, %v313
    %v331 = vunpack.c.l.b16 %v294
    %v332 = vunpack.c.l.b16 %v295
    %v333 = vunpack.c.l.b16 %v296
    %v334 = vunpack.c.l.b16 %v297
    %v335 = vunpack.c.l.b16 %v298
    %v336 = vunpack.c.l.b16 %v299
    %v337 = vunpack.c.l.b16 %v300
    %v338 = vunpack.c.l.b16 %v301
    %v339 = vunpack.c.l.b16 %v302
    %v340 = vunpack.c.l.b16 %v303
    %v341 = vunpack.c.l.b16 %v304
    %v342 = vunpack.c.l.b16 %v305
    %v343 = vunpack.c.l.b16 %v306
    %v344 = vunpack.c.l.b16 %v307
    %v345 = vunpack.c.l.b16 %v308
    %v346 = vunpack.c.l.b16 %v309
    %v347 = vpack.c.b16 %v332, %v331
    %v348 = vpack.c.b16 %v334, %v333
    %v349 = vpack.c.b16 %v336, %v335
    %v350 = vpack.c.b16 %v338, %v337
    %v351 = vpack.c.b16 %v340, %v339
    %v352 = vpack.c.b16 %v342, %v341
    %v353 = vpack.c.b16 %v344, %v343
    %v354 = vpack.c.b16 %v346, %v345
    %363 = vmatprep.subr.bf16.mxu0 0
    %364 = vmatpush1.bf16.msra.mxu0 %v354
    %365 = vmatprep.subr.bf16.mxu0 0
    %366 = vmatpush1.bf16.msra.mxu0 %v353
    %367 = vmatprep.subr.bf16.mxu0 0
    %368 = vmatpush1.bf16.msra.mxu0 %v352
    %369 = vmatprep.subr.bf16.mxu0 0
    %370 = vmatpush1.bf16.msra.mxu0 %v351
    %371 = vmatprep.subr.bf16.mxu0 0
    %372 = vmatpush1.bf16.msra.mxu0 %v350
    %373 = vmatprep.subr.bf16.mxu0 0
    %374 = vmatpush1.bf16.msra.mxu0 %v349
    %375 = vmatprep.subr.bf16.mxu0 0
    %376 = vmatpush1.bf16.msra.mxu0 %v348
    %377 = vmatprep.subr.bf16.mxu0 0
    %378 = vmatpush1.bf16.msra.mxu0 %v347
    %379 = vmatprep.subr.bf16.mxu0 0
    %380 = vmatpush2.bf16.msra.mxu0 0
    %381 = vmatprep.subr.bf16.mxu0 0
    %382 = vmatpush2.bf16.msra.mxu0 0
    %383 = vmatprep.subr.bf16.mxu0 0
    %384 = vmatpush2.bf16.msra.mxu0 0
    %385 = vmatprep.subr.bf16.mxu0 0
    %386 = vmatpush2.bf16.msra.mxu0 0
    %387 = vmatprep.subr.bf16.mxu0 0
    %388 = vmatpush2.bf16.msra.mxu0 0
    %389 = vmatprep.subr.bf16.mxu0 0
    %390 = vmatpush2.bf16.msra.mxu0 0
    %391 = vmatprep.subr.bf16.mxu0 0
    %392 = vmatpush2.bf16.msra.mxu0 0
    %393 = vmatprep.subr.bf16.mxu0 0
    %394 = vmatpush2.bf16.msra.mxu0 0
    %395 = vmatprep.mubr.bf16.mxu0 0
    %396 = vmatmul.mubr.bf16.gmra.mxu0 %v292
    %v397 = vpop.f32.mrf.mxu0
    %v398 = vadd.f32 %v314, %v397
    %v399 = vpop.f32.mrf.mxu0
    %v400 = vpop.f32.mrf.mxu0
    %v401 = vadd.f32 %v314, %v400
    %v402 = vpop.f32.mrf.mxu0
    %403 = vdwg.mxu0
    %v404 = vmul.f32 %v398, 1.442695
    %v405 = vpow.pop %v404
    %v406 = vmul.f32 %v401, 1.442695
    %v407 = vpow.pop %v406
    %v408 = vrsqrt.pop %v405
    %v409 = vmul.f32 %v405, %v408
    %vm410 = vcmp.eq.f32.partialorder %v405, inf
    %v411 = vsel %vm410, %v405, %v409
    %vm412 = vcmp.eq.f32.partialorder %v405, 0.0
    %v413 = vand.u32 %v405, 2147483648
    %v414 = vsel %vm412, %v413, %v411
    %v415 = vrsqrt.pop %v407
    %v416 = vmul.f32 %v407, %v415
    %vm417 = vcmp.eq.f32.partialorder %v407, inf
    %v418 = vsel %vm417, %v407, %v416
    %vm419 = vcmp.eq.f32.partialorder %v407, 0.0
    %v420 = vand.u32 %v407, 2147483648
    %v421 = vsel %vm419, %v420, %v418
    %424 = vrot.lane.b32.xlu0 %v414, 16
    %v425 = vpop.permute.xlu0 %424
    %426 = vrot.lane.b32.xlu0 %v421, 16
    %v427 = vpop.permute.xlu0 %426
    %v430 = vmul.f32 %v55, %v425
    %v431 = vmul.f32 %v56, %v427
    %434 = vrot.lane.b32.xlu0 %v430, 104
    %v435 = vpop.permute.xlu0 %434
    %436 = vrot.lane.b32.xlu0 %v431, 104
    %v437 = vpop.permute.xlu0 %436
    %v440 = vadd.f32 %v398, %v435
    %v441 = vadd.f32 %v401, %v437
    %vm442 = vcmask 64512
    %v443 = vsel %vm442, %v440, 0.0
    %v444 = vsel %vm442, %v441, 0.0
    %v445 = vpack.c.bf16 %v444, %v443
    %s446 = scalar_lea.vmem [#allocation5], 192
    %v447 = vld [vmem:[%s446] sm:$0xf]
    %v448 = vld [vmem:[%s446 + $0x4] sm:$0xf]
    %v449 = vld [vmem:[%s446 + $0x8] sm:$0xf]
    %v450 = vld [vmem:[%s446 + $0xc] sm:$0xf]
    %v451 = vld [vmem:[%s446 + $0x10] sm:$0xf]
    %v452 = vld [vmem:[%s446 + $0x14] sm:$0xf]
    %v453 = vld [vmem:[%s446 + $0x18] sm:$0xf]
    %v454 = vld [vmem:[%s446 + $0x1c] sm:$0xf]
    %v455 = vld [vmem:[%s446 + $0x20] sm:$0xf]
    %v456 = vld [vmem:[%s446 + $0x24] sm:$0xf]
    %v457 = vld [vmem:[%s446 + $0x28] sm:$0xf]
    %v458 = vld [vmem:[%s446 + $0x2c] sm:$0xf]
    %v459 = vld [vmem:[%s446 + $0x30] sm:$0xf]
    %v460 = vld [vmem:[%s446 + $0x34] sm:$0xf]
    %v461 = vld [vmem:[%s446 + $0x38] sm:$0xf]
    %v462 = vld [vmem:[%s446 + $0x3c] sm:$0xf]
    %v463 = vld [vmem:[#allocation7 + $0x3] sm:$0x1]
    %v464 = vlaneseq
    %v465 = vshrl.u32 %v464, 7
    %v466 = vsub.s32 0, %v465
    %v467 = vrot.slane %v463, %v466
    %v484 = vunpack.c.l.b16 %v447
    %v485 = vunpack.c.l.b16 %v448
    %v486 = vunpack.c.l.b16 %v449
    %v487 = vunpack.c.l.b16 %v450
    %v488 = vunpack.c.l.b16 %v451
    %v489 = vunpack.c.l.b16 %v452
    %v490 = vunpack.c.l.b16 %v453
    %v491 = vunpack.c.l.b16 %v454
    %v492 = vunpack.c.l.b16 %v455
    %v493 = vunpack.c.l.b16 %v456
    %v494 = vunpack.c.l.b16 %v457
    %v495 = vunpack.c.l.b16 %v458
    %v496 = vunpack.c.l.b16 %v459
    %v497 = vunpack.c.l.b16 %v460
    %v498 = vunpack.c.l.b16 %v461
    %v499 = vunpack.c.l.b16 %v462
    %v500 = vpack.c.b16 %v485, %v484
    %v501 = vpack.c.b16 %v487, %v486
    %v502 = vpack.c.b16 %v489, %v488
    %v503 = vpack.c.b16 %v491, %v490
    %v504 = vpack.c.b16 %v493, %v492
    %v505 = vpack.c.b16 %v495, %v494
    %v506 = vpack.c.b16 %v497, %v496
    %v507 = vpack.c.b16 %v499, %v498
    %516 = vmatprep.subr.bf16.mxu0 0
    %517 = vmatpush1.bf16.msra.mxu0 %v507
    %518 = vmatprep.subr.bf16.mxu0 0
    %519 = vmatpush1.bf16.msra.mxu0 %v506
    %520 = vmatprep.subr.bf16.mxu0 0
    %521 = vmatpush1.bf16.msra.mxu0 %v505
    %522 = vmatprep.subr.bf16.mxu0 0
    %523 = vmatpush1.bf16.msra.mxu0 %v504
    %524 = vmatprep.subr.bf16.mxu0 0
    %525 = vmatpush1.bf16.msra.mxu0 %v503
    %526 = vmatprep.subr.bf16.mxu0 0
    %527 = vmatpush1.bf16.msra.mxu0 %v502
    %528 = vmatprep.subr.bf16.mxu0 0
    %529 = vmatpush1.bf16.msra.mxu0 %v501
    %530 = vmatprep.subr.bf16.mxu0 0
    %531 = vmatpush1.bf16.msra.mxu0 %v500
    %532 = vmatprep.subr.bf16.mxu0 0
    %533 = vmatpush2.bf16.msra.mxu0 0
    %534 = vmatprep.subr.bf16.mxu0 0
    %535 = vmatpush2.bf16.msra.mxu0 0
    %536 = vmatprep.subr.bf16.mxu0 0
    %537 = vmatpush2.bf16.msra.mxu0 0
    %538 = vmatprep.subr.bf16.mxu0 0
    %539 = vmatpush2.bf16.msra.mxu0 0
    %540 = vmatprep.subr.bf16.mxu0 0
    %541 = vmatpush2.bf16.msra.mxu0 0
    %542 = vmatprep.subr.bf16.mxu0 0
    %543 = vmatpush2.bf16.msra.mxu0 0
    %544 = vmatprep.subr.bf16.mxu0 0
    %545 = vmatpush2.bf16.msra.mxu0 0
    %546 = vmatprep.subr.bf16.mxu0 0
    %547 = vmatpush2.bf16.msra.mxu0 0
    %548 = vmatprep.mubr.bf16.mxu0 0
    %549 = vmatmul.mubr.bf16.gmra.mxu0 %v445
    %v550 = vpop.f32.mrf.mxu0
    %v551 = vadd.f32 %v467, %v550
    %v552 = vpop.f32.mrf.mxu0
    %v553 = vpop.f32.mrf.mxu0
    %v554 = vadd.f32 %v467, %v553
    %v555 = vpop.f32.mrf.mxu0
    %556 = vdwg.mxu0
    %vm557 = vcmp.ge.f32.partialorder %v551, 0.0
    %vm558 = vcmp.ge.f32.partialorder %v554, 0.0
    %v559 = vmul.f32 %v551, 0.1
    %v560 = vmul.f32 %v554, 0.1
    %v561 = vsel %vm557, %v551, %v559
    %v562 = vsel %vm558, %v554, %v560
    %v563 = vpack.c.bf16 %v562, %v561
    %s564 = scalar_lea.vmem [#allocation5], 256
    %v565 = vld [vmem:[%s564] sm:$0xf]
    %v566 = vld [vmem:[%s564 + $0x4] sm:$0xf]
    %v567 = vld [vmem:[%s564 + $0x8] sm:$0xf]
    %v568 = vld [vmem:[%s564 + $0xc] sm:$0xf]
    %v569 = vld [vmem:[%s564 + $0x10] sm:$0xf]
    %v570 = vld [vmem:[%s564 + $0x14] sm:$0xf]
    %v571 = vld [vmem:[%s564 + $0x18] sm:$0xf]
    %v572 = vld [vmem:[%s564 + $0x1c] sm:$0xf]
    %v573 = vld [vmem:[%s564 + $0x20] sm:$0xf]
    %v574 = vld [vmem:[%s564 + $0x24] sm:$0xf]
    %v575 = vld [vmem:[%s564 + $0x28] sm:$0xf]
    %v576 = vld [vmem:[%s564 + $0x2c] sm:$0xf]
    %v577 = vld [vmem:[%s564 + $0x30] sm:$0xf]
    %v578 = vld [vmem:[%s564 + $0x34] sm:$0xf]
    %v579 = vld [vmem:[%s564 + $0x38] sm:$0xf]
    %v580 = vld [vmem:[%s564 + $0x3c] sm:$0xf]
    %v581 = vld [vmem:[#allocation7 + $0x4] sm:$0x1]
    %v582 = vlaneseq
    %v583 = vshrl.u32 %v582, 7
    %v584 = vsub.s32 0, %v583
    %v585 = vrot.slane %v581, %v584
    %v602 = vunpack.c.l.b16 %v565
    %v603 = vunpack.c.l.b16 %v566
    %v604 = vunpack.c.l.b16 %v567
    %v605 = vunpack.c.l.b16 %v568
    %v606 = vunpack.c.l.b16 %v569
    %v607 = vunpack.c.l.b16 %v570
    %v608 = vunpack.c.l.b16 %v571
    %v609 = vunpack.c.l.b16 %v572
    %v610 = vunpack.c.l.b16 %v573
    %v611 = vunpack.c.l.b16 %v574
    %v612 = vunpack.c.l.b16 %v575
    %v613 = vunpack.c.l.b16 %v576
    %v614 = vunpack.c.l.b16 %v577
    %v615 = vunpack.c.l.b16 %v578
    %v616 = vunpack.c.l.b16 %v579
    %v617 = vunpack.c.l.b16 %v580
    %v618 = vpack.c.b16 %v603, %v602
    %v619 = vpack.c.b16 %v605, %v604
    %v620 = vpack.c.b16 %v607, %v606
    %v621 = vpack.c.b16 %v609, %v608
    %v622 = vpack.c.b16 %v611, %v610
    %v623 = vpack.c.b16 %v613, %v612
    %v624 = vpack.c.b16 %v615, %v614
    %v625 = vpack.c.b16 %v617, %v616
    %634 = vmatprep.subr.bf16.mxu0 0
    %635 = vmatpush1.bf16.msra.mxu0 %v625
    %636 = vmatprep.subr.bf16.mxu0 0
    %637 = vmatpush1.bf16.msra.mxu0 %v624
    %638 = vmatprep.subr.bf16.mxu0 0
    %639 = vmatpush1.bf16.msra.mxu0 %v623
    %640 = vmatprep.subr.bf16.mxu0 0
    %641 = vmatpush1.bf16.msra.mxu0 %v622
    %642 = vmatprep.subr.bf16.mxu0 0
    %643 = vmatpush1.bf16.msra.mxu0 %v621
    %644 = vmatprep.subr.bf16.mxu0 0
    %645 = vmatpush1.bf16.msra.mxu0 %v620
    %646 = vmatprep.subr.bf16.mxu0 0
    %647 = vmatpush1.bf16.msra.mxu0 %v619
    %648 = vmatprep.subr.bf16.mxu0 0
    %649 = vmatpush1.bf16.msra.mxu0 %v618
    %650 = vmatprep.subr.bf16.mxu0 0
    %651 = vmatpush2.bf16.msra.mxu0 0
    %652 = vmatprep.subr.bf16.mxu0 0
    %653 = vmatpush2.bf16.msra.mxu0 0
    %654 = vmatprep.subr.bf16.mxu0 0
    %655 = vmatpush2.bf16.msra.mxu0 0
    %656 = vmatprep.subr.bf16.mxu0 0
    %657 = vmatpush2.bf16.msra.mxu0 0
    %658 = vmatprep.subr.bf16.mxu0 0
    %659 = vmatpush2.bf16.msra.mxu0 0
    %660 = vmatprep.subr.bf16.mxu0 0
    %661 = vmatpush2.bf16.msra.mxu0 0
    %662 = vmatprep.subr.bf16.mxu0 0
    %663 = vmatpush2.bf16.msra.mxu0 0
    %664 = vmatprep.subr.bf16.mxu0 0
    %665 = vmatpush2.bf16.msra.mxu0 0
    %666 = vmatprep.mubr.bf16.mxu0 0
    %667 = vmatmul.mubr.bf16.gmra.mxu0 %v563
    %v668 = vpop.f32.mrf.mxu0
    %v669 = vadd.f32 %v585, %v668
    %v670 = vpop.f32.mrf.mxu0
    %v671 = vpop.f32.mrf.mxu0
    %v672 = vadd.f32 %v585, %v671
    %v673 = vpop.f32.mrf.mxu0
    %674 = vdwg.mxu0
    %vm675 = vcmp.ge.f32.partialorder %v669, 0.0
    %vm676 = vcmp.ge.f32.partialorder %v672, 0.0
    %v677 = vmul.f32 %v669, 0.1
    %v678 = vmul.f32 %v672, 0.1
    %v679 = vsel %vm675, %v669, %v677
    %v680 = vsel %vm676, %v672, %v678
    %v681 = vpack.c.bf16 %v680, %v679
    %s682 = scalar_lea.vmem [#allocation5], 320
    %v683 = vld [vmem:[%s682] sm:$0xf]
    %v684 = vld [vmem:[%s682 + $0x4] sm:$0xf]
    %v685 = vld [vmem:[%s682 + $0x8] sm:$0xf]
    %v686 = vld [vmem:[%s682 + $0xc] sm:$0xf]
    %v687 = vld [vmem:[%s682 + $0x10] sm:$0xf]
    %v688 = vld [vmem:[%s682 + $0x14] sm:$0xf]
    %v689 = vld [vmem:[%s682 + $0x18] sm:$0xf]
    %v690 = vld [vmem:[%s682 + $0x1c] sm:$0xf]
    %v691 = vld [vmem:[%s682 + $0x20] sm:$0xf]
    %v692 = vld [vmem:[%s682 + $0x24] sm:$0xf]
    %v693 = vld [vmem:[%s682 + $0x28] sm:$0xf]
    %v694 = vld [vmem:[%s682 + $0x2c] sm:$0xf]
    %v695 = vld [vmem:[%s682 + $0x30] sm:$0xf]
    %v696 = vld [vmem:[%s682 + $0x34] sm:$0xf]
    %v697 = vld [vmem:[%s682 + $0x38] sm:$0xf]
    %v698 = vld [vmem:[%s682 + $0x3c] sm:$0xf]
    %v699 = vld [vmem:[#allocation7 + $0x5] sm:$0x1]
    %v700 = vlaneseq
    %v701 = vshrl.u32 %v700, 7
    %v702 = vsub.s32 0, %v701
    %v703 = vrot.slane %v699, %v702
    %v720 = vunpack.c.l.b16 %v683
    %v721 = vunpack.c.l.b16 %v684
    %v722 = vunpack.c.l.b16 %v685
    %v723 = vunpack.c.l.b16 %v686
    %v724 = vunpack.c.l.b16 %v687
    %v725 = vunpack.c.l.b16 %v688
    %v726 = vunpack.c.l.b16 %v689
    %v727 = vunpack.c.l.b16 %v690
    %v728 = vunpack.c.l.b16 %v691
    %v729 = vunpack.c.l.b16 %v692
    %v730 = vunpack.c.l.b16 %v693
    %v731 = vunpack.c.l.b16 %v694
    %v732 = vunpack.c.l.b16 %v695
    %v733 = vunpack.c.l.b16 %v696
    %v734 = vunpack.c.l.b16 %v697
    %v735 = vunpack.c.l.b16 %v698
    %v736 = vpack.c.b16 %v721, %v720
    %v737 = vpack.c.b16 %v723, %v722
    %v738 = vpack.c.b16 %v725, %v724
    %v739 = vpack.c.b16 %v727, %v726
    %v740 = vpack.c.b16 %v729, %v728
    %v741 = vpack.c.b16 %v731, %v730
    %v742 = vpack.c.b16 %v733, %v732
    %v743 = vpack.c.b16 %v735, %v734
    %752 = vmatprep.subr.bf16.mxu0 0
    %753 = vmatpush1.bf16.msra.mxu0 %v743
    %754 = vmatprep.subr.bf16.mxu0 0
    %755 = vmatpush1.bf16.msra.mxu0 %v742
    %756 = vmatprep.subr.bf16.mxu0 0
    %757 = vmatpush1.bf16.msra.mxu0 %v741
    %758 = vmatprep.subr.bf16.mxu0 0
    %759 = vmatpush1.bf16.msra.mxu0 %v740
    %760 = vmatprep.subr.bf16.mxu0 0
    %761 = vmatpush1.bf16.msra.mxu0 %v739
    %762 = vmatprep.subr.bf16.mxu0 0
    %763 = vmatpush1.bf16.msra.mxu0 %v738
    %764 = vmatprep.subr.bf16.mxu0 0
    %765 = vmatpush1.bf16.msra.mxu0 %v737
    %766 = vmatprep.subr.bf16.mxu0 0
    %767 = vmatpush1.bf16.msra.mxu0 %v736
    %768 = vmatprep.subr.bf16.mxu0 0
    %769 = vmatpush2.bf16.msra.mxu0 0
    %770 = vmatprep.subr.bf16.mxu0 0
    %771 = vmatpush2.bf16.msra.mxu0 0
    %772 = vmatprep.subr.bf16.mxu0 0
    %773 = vmatpush2.bf16.msra.mxu0 0
    %774 = vmatprep.subr.bf16.mxu0 0
    %775 = vmatpush2.bf16.msra.mxu0 0
    %776 = vmatprep.subr.bf16.mxu0 0
    %777 = vmatpush2.bf16.msra.mxu0 0
    %778 = vmatprep.subr.bf16.mxu0 0
    %779 = vmatpush2.bf16.msra.mxu0 0
    %780 = vmatprep.subr.bf16.mxu0 0
    %781 = vmatpush2.bf16.msra.mxu0 0
    %782 = vmatprep.subr.bf16.mxu0 0
    %783 = vmatpush2.bf16.msra.mxu0 0
    %784 = vmatprep.mubr.bf16.mxu0 0
    %785 = vmatmul.mubr.bf16.gmra.mxu0 %v681
    %v786 = vpop.f32.mrf.mxu0
    %v787 = vadd.f32 %v703, %v786
    %v788 = vpop.f32.mrf.mxu0
    %v789 = vpop.f32.mrf.mxu0
    %v790 = vadd.f32 %v703, %v789
    %v791 = vpop.f32.mrf.mxu0
    %792 = vdwg.mxu0
    %795 = vrot.lane.b32.xlu0 %v398, 16
    %v796 = vpop.permute.xlu0 %795
    %797 = vrot.lane.b32.xlu0 %v401, 16
    %v798 = vpop.permute.xlu0 %797
    %803 = vrot.lane.b32.xlu0 %v405, 16
    %v804 = vpop.permute.xlu0 %803
    %805 = vrot.lane.b32.xlu0 %v407, 16
    %v806 = vpop.permute.xlu0 %805
    %811 = vrot.lane.b32.xlu0 %v440, 32
    %v812 = vpop.permute.xlu0 %811
    %813 = vrot.lane.b32.xlu0 %v441, 32
    %v814 = vpop.permute.xlu0 %813
    %817 = vrot.lane.b32.xlu0 %v405, 24
    %v818 = vpop.permute.xlu0 %817
    %819 = vrot.lane.b32.xlu0 %v407, 24
    %v820 = vpop.permute.xlu0 %819
    %vm823 = vcmask 130048
    %v824 = vsel %vm823, %v787, %v796
    %v825 = vsel %vm823, %v790, %v798
    %vm826 = vcmask 195584
    %v827 = vsel %vm826, %v824, %v804
    %v828 = vsel %vm826, %v825, %v806
    %vm829 = vcmask 261120
    %v830 = vsel %vm829, %v827, %v812
    %v831 = vsel %vm829, %v828, %v814
    %vm832 = vcmask 326656
    %v833 = vsel %vm832, %v830, %v818
    %v834 = vsel %vm832, %v831, %v820
    %vm835 = vcmask 392192
    %v836 = vsel %vm835, %v833, 0.0
    %v837 = vsel %vm835, %v834, 0.0
    %838 = vst [vmem:[#allocation8] sm:$0xff] %v836
    %839 = vst [vmem:[#allocation8 + $0x8] sm:$0xff] %v837
    // Predicated region
    $region26: #{tpu_custom_call.1} parent=1 // pred_check
      _
    $region27: #{tpu_custom_call.1} parent=1 // pred_check_branch
      %841 = sbr.rel (0) target = $region29
    $region28: #{tpu_custom_call.1} parent=1 // pred_region
      %s843 = ssub.s32 256, 256
      %844 = vsyncadd [#allocation4], %s843
      %s845 = sshll.u32 [#allocation8], 4
      %s846 = int_to_ptr.vmem [resolvable:$true] %s845
      %851 = dma.vmem_to_hbm [thread:$0]  %s846, 256, %s3, [#allocation4], 128, 128, 8
    $region29: #{tpu_custom_call.1} parent=1 // pred_fallthru
      _
    // Predicated region
    $region30: #{tpu_custom_call.1} parent=1 // pred_check
      _
    $region31: #{tpu_custom_call.1} parent=1 // pred_check_branch
      %853 = sbr.rel (0) target = $region33
    $region32: #{tpu_custom_call.1} parent=1 // pred_region
      %854 = dma.done [#allocation4], 256
    $region33: #{tpu_custom_call.1} parent=1 // pred_fallthru
      _
    %855 = vsyncpa [#allocation3], 1
    %856 = vsyncpa [#allocation6], 1
    %857 = vsyncpa [#allocation4], 1

</llo_original>
